<compile_context>
chip_gen: v5e
topology: v5e:2x2
jax: 0.10.0
libtpu: 0.0.40
codegen_flags: <defaults>
</compile_context>

<pallas_src>
import functools

import jax
import jax.numpy as jnp
from jax.experimental import pallas as pl
from jax.experimental.pallas import tpu as pltpu


def _patch_latent_kernel(x_ref, w_ref, pos_ref, o_ref):
    # x_ref:   (1, TN, K)  one tile of one batch element's flattened patches
    # w_ref:   (K, E)      flattened conv weight (transposed); constant block
    #                      index -> DMA'd once, VMEM-resident.
    # pos_ref: (TN, E)     f32 positional embedding with conv bias folded in;
    #                      block index depends only on n, so it stays resident
    #                      across the inner batch sweep of the (n, b) grid.
    # o_ref:   (1, TN, E)  output tile (full, lane-dense E).
    y = jnp.dot(x_ref[0], w_ref[...], preferred_element_type=jnp.float32)
    o_ref[0] = (y + pos_ref[...]).astype(o_ref.dtype)


def _choose_tile_n(n, batch, sublane_align, max_tile=512):
    """Tile size along the patch axis (must divide n exactly).

    Preference order (first hit wins; largest qualifying tile is taken):
      1) enough grid steps for pipelining / v7x megacore (>= ~4 total steps,
         and never a (1, 1) grid when batch == 1), 128-aligned tile
      2) same step requirement, sublane-aligned tile (8 for f32, 16 for bf16)
      3) the same two alignments with the step requirement dropped
      4) the full extent (always a legal block dim)
    """
    min_n_tiles = max(1, -(-4 // batch))          # aim for >= 4 total steps
    if batch == 1:
        min_n_tiles = max(min_n_tiles, 2)         # never a degenerate (1,1) grid

    def _largest(align, need_tiles):
        best = None
        t = align
        while t <= min(n, max_tile):
            if n % t == 0 and n // t >= need_tiles:
                best = t
            t += align
        return best

    for need in (min_n_tiles, 1):
        for align in (128, sublane_align):
            t = _largest(align, need)
            if t is not None:
                return t
    return n


@functools.partial(
    jax.jit, static_argnames=("patch_size", "compute_dtype", "out_dtype")
)
def patch_latent_forward(x_nchw, conv_w, conv_b, pos_embed, patch_size,
                         compute_dtype=jnp.bfloat16, out_dtype=None):
    """x_nchw: [B, C, H, W]; conv_w: [E, C, p, p]; conv_b: [E];
    pos_embed: [1, N, E].  Returns [B, N, E] (PatchLatent.forward).

    compute_dtype: dtype for x / W feeding the MXU (default bf16 — native MXU
    dtype, halves x/W HBM bytes on the mem-bound v6e/v7x). Accumulation and
    the +pos epilogue are always f32. Pass jnp.float32 (or None to keep the
    input dtype) for exact f32 math.
    """
    B, C, H, W = x_nchw.shape
    E = conv_w.shape[0]
    p = patch_size
    Hp, Wp = H // p, W // p
    N = Hp * Wp
    K = C * p * p

    if out_dtype is None:
        out_dtype = x_nchw.dtype

    # Cast BEFORE the patchify transpose so the materialized [B, N, K]
    # intermediate (and its HBM write + kernel re-read) is in compute_dtype.
    x_src = x_nchw
    if compute_dtype is not None and x_src.dtype != jnp.dtype(compute_dtype):
        x_src = x_src.astype(compute_dtype)

    # Glue (jitted, fuses with producers): non-overlapping patches -> [B, N, K]
    # ordered (C, ph, pw), matching the flattened conv weight and
    # flatten(2).transpose(1, 2) of the conv output.
    x_patches = (
        x_src.reshape(B, C, Hp, p, Wp, p)
        .transpose(0, 2, 4, 1, 3, 5)           # [B, Hp, Wp, C, p, p]
        .reshape(B, N, K)
    )
    w_mat = conv_w.reshape(E, K).T              # [K, E]
    if compute_dtype is not None and w_mat.dtype != jnp.dtype(compute_dtype):
        w_mat = w_mat.astype(compute_dtype)

    # Fold the conv bias into the positional embedding. Kept f32: after the
    # grid reorder pos is fetched once per n-tile (N*E*4 bytes total), so the
    # traffic is negligible and the bias keeps full precision.
    pos = (pos_embed.reshape(N, E).astype(jnp.float32)
           + conv_b.reshape(1, E).astype(jnp.float32))

    # --- tiling ---------------------------------------------------------
    x_isz = jnp.dtype(x_patches.dtype).itemsize
    w_isz = jnp.dtype(w_mat.dtype).itemsize
    o_isz = jnp.dtype(out_dtype).itemsize
    sublane_align = 16 if x_isz == 2 else 8     # bf16 min tile is (16, 128)

    tn = _choose_tile_n(N, B, sublane_align)
    num_n_tiles = N // tn
    grid = (num_n_tiles, B)                     # n outer, b inner -> pos resident

    # Per-step VMEM (double-buffered inputs/outputs; weight counted at 2x even
    # though it is revisited). Clamp to 48 MiB so v7x's 64-MiB physical VMEM
    # always has headroom.
    dbuf_bytes = (
        2 * tn * K * x_isz            # x tile
        + 2 * K * E * w_isz           # weight (resident, conservatively 2x)
        + 2 * tn * E * 4              # pos tile (f32)
        + 2 * tn * E * o_isz          # out tile
    )
    vmem_limit = int(min(48 * 1024 * 1024,
                         max(32 * 1024 * 1024, 2 * dbuf_bytes)))

    # Kernel-side traffic only (the wrapper patchify is a separate XLA op
    # whose cost XLA already models). pos is read once total (resident).
    cost = pl.CostEstimate(
        flops=2 * B * N * K * E,
        transcendentals=0,
        bytes_accessed=(B * N * K * x_isz + K * E * w_isz
                        + N * E * 4 + B * N * E * o_isz),
    )

    out = pl.pallas_call(
        _patch_latent_kernel,
        out_shape=jax.ShapeDtypeStruct((B, N, E), out_dtype),
        grid_spec=pl.GridSpec(
            grid=grid,
            in_specs=[
                pl.BlockSpec((1, tn, K), lambda n, b: (b, n, 0)),
                pl.BlockSpec((K, E), lambda n, b: (0, 0)),
                pl.BlockSpec((tn, E), lambda n, b: (n, 0)),
            ],
            out_specs=pl.BlockSpec((1, tn, E), lambda n, b: (b, n, 0)),
        ),
        compiler_params=pltpu.CompilerParams(
            dimension_semantics=("parallel", "parallel"),
            vmem_limit_bytes=vmem_limit,
        ),
        cost_estimate=cost,
    )(x_patches, w_mat, pos)
    return out


def patch_latent_reference(x_nchw, conv_w, conv_b, pos_embed, patch_size):
    """Pure-JAX reference (same math, no Pallas) for verification."""
    B, C, H, W = x_nchw.shape
    E = conv_w.shape[0]
    p = patch_size
    Hp, Wp = H // p, W // p
    N = Hp * Wp
    K = C * p * p
    x_patches = (
        x_nchw.reshape(B, C, Hp, p, Wp, p)
        .transpose(0, 2, 4, 1, 3, 5)
        .reshape(B, N, K)
    )
    y = jnp.einsum("bnk,ek->bne", x_patches, conv_w.reshape(E, K)) + conv_b
    return y + pos_embed


if __name__ == "__main__":
    # Small shapes consistent with the module.
    B, C, H, W = 2, 4, 16, 16
    embed_dim = 32
    patch_size = 2
    num_patches = (H // patch_size) ** 2  # 64

    key = jax.random.PRNGKey(0)
    k_x, k_w, k_b, k_pos = jax.random.split(key, 4)

    x = jax.random.normal(k_x, (B, C, H, W), dtype=jnp.float32)
    # Conv2d weight/bias shapes from __init__; pos_embed is zeros in the module
    # but we use small random values so the add path is exercised.
    conv_w = jax.random.normal(
        k_w, (embed_dim, C, patch_size, patch_size), dtype=jnp.float32
    ) * 0.1
    conv_b = jax.random.normal(k_b, (embed_dim,), dtype=jnp.float32) * 0.1
    pos_embed = jax.random.normal(
        k_pos, (1, num_patches, embed_dim), dtype=jnp.float32
    ) * 0.02

    ref = patch_latent_reference(x, conv_w, conv_b, pos_embed, patch_size)

    # Exact f32 path (bit-level-ish vs reference).
    out_f32 = patch_latent_forward(
        x, conv_w, conv_b, pos_embed, patch_size, compute_dtype=jnp.float32
    )
    out_f32 = jax.block_until_ready(out_f32)
    assert out_f32.shape == (B, num_patches, embed_dim), out_f32.shape
    assert jnp.allclose(out_f32, ref, atol=1e-5, rtol=1e-5), (
        float(jnp.max(jnp.abs(out_f32 - ref)))
    )

    # Default bf16 compute path (the v6e/v7x production path): x / W rounded
    # to bf16, f32 accumulation and f32 +pos epilogue, f32 output here.
    out_bf16 = patch_latent_forward(x, conv_w, conv_b, pos_embed, patch_size)
    out_bf16 = jax.block_until_ready(out_bf16)
    assert out_bf16.shape == (B, num_patches, embed_dim), out_bf16.shape
    assert jnp.allclose(
        out_bf16.astype(jnp.float32), ref, atol=5e-2, rtol=5e-2
    ), float(jnp.max(jnp.abs(out_bf16.astype(jnp.float32) - ref)))

    print("KERNEL_OK")
</pallas_src>

<mosaic_0001>
module attributes {stable_mosaic.version = 11 : i64} {
  func.func @_patch_latent_kernel(%arg0: i32, %arg1: i32, %arg2: memref<1x32x16xf32, #tpu.memory_space<vmem>>, %arg3: memref<16x32xf32, #tpu.memory_space<vmem>>, %arg4: memref<32x32xf32, #tpu.memory_space<vmem>>, %arg5: memref<1x32x32xf32, #tpu.memory_space<vmem>>) attributes {dimension_semantics = [#tpu.dimension_semantics<parallel>, #tpu.dimension_semantics<parallel>], iteration_bounds = array<i64: 2, 2>, scalar_prefetch = 0 : i64, scratch_operands = 0 : i64, tpu.core_type = #tpu.core_type<tc>, window_params = [{transform_indices = @transform_0, window_bounds = array<i64: 1, 32, 16>}, {pipeline_mode = #tpu.pipeline_mode<synchronous>, transform_indices = @transform_1, window_bounds = array<i64: 16, 32>}, {transform_indices = @transform_2, window_bounds = array<i64: 32, 32>}, {transform_indices = @transform_3, window_bounds = array<i64: 1, 32, 32>}]} {
    %c0 = arith.constant 0 : index
    %c0_0 = arith.constant 0 : index
    %c0_1 = arith.constant 0 : index
    %0 = vector.load %arg2[%c0, %c0_0, %c0_1] : memref<1x32x16xf32, #tpu.memory_space<vmem>>, vector<1x32x16xf32>
    %1 = vector.shape_cast %0 : vector<1x32x16xf32> to vector<32x16xf32>
    %c0_2 = arith.constant 0 : index
    %c0_3 = arith.constant 0 : index
    %2 = vector.load %arg3[%c0_2, %c0_3] : memref<16x32xf32, #tpu.memory_space<vmem>>, vector<16x32xf32>
    %cst = arith.constant dense<0.000000e+00> : vector<32x32xf32>
    %3 = tpu.matmul %1, %2, %cst {dimension_numbers = #tpu.dot_dimension_numbers<[1], [0], [0], [1], [0, 0, 1, 1], [], []>} : vector<32x16xf32>, vector<16x32xf32>, vector<32x32xf32> -> vector<32x32xf32>
    %c0_4 = arith.constant 0 : index
    %c0_5 = arith.constant 0 : index
    %4 = vector.load %arg4[%c0_4, %c0_5] : memref<32x32xf32, #tpu.memory_space<vmem>>, vector<32x32xf32>
    %5 = arith.addf %3, %4 : vector<32x32xf32>
    %c0_6 = arith.constant 0 : index
    %c0_7 = arith.constant 0 : index
    %c0_8 = arith.constant 0 : index
    %6 = vector.load %arg5[%c0_6, %c0_7, %c0_8] : memref<1x32x32xf32, #tpu.memory_space<vmem>>, vector<1x32x32xf32>
    %7 = vector.shape_cast %6 : vector<1x32x32xf32> to vector<32x32xf32>
    %8 = vector.shape_cast %5 : vector<32x32xf32> to vector<1x32x32xf32>
    tpu.vector_store %arg5[%c0_6, %c0_7, %c0_8], %8 {strides = array<i32>} : memref<1x32x32xf32, #tpu.memory_space<vmem>>, vector<1x32x32xf32>,
    return
  }
  func.func @transform_0(%arg0: i32, %arg1: i32) -> (i32, i32, i32) {
    %c0_i32 = arith.constant 0 : i32
    %c0_i32_0 = arith.constant 0 : i32
    return %arg1, %arg0, %c0_i32 : i32, i32, i32
  }
  func.func @transform_1(%arg0: i32, %arg1: i32) -> (i32, i32) {
    %c0_i32 = arith.constant 0 : i32
    %c0_i32_0 = arith.constant 0 : i32
    %c0_i32_1 = arith.constant 0 : i32
    return %c0_i32, %c0_i32_0 : i32, i32
  }
  func.func @transform_2(%arg0: i32, %arg1: i32) -> (i32, i32) {
    %c0_i32 = arith.constant 0 : i32
    %c0_i32_0 = arith.constant 0 : i32
    return %arg0, %c0_i32 : i32, i32
  }
  func.func @transform_3(%arg0: i32, %arg1: i32) -> (i32, i32, i32) {
    %c0_i32 = arith.constant 0 : i32
    %c0_i32_0 = arith.constant 0 : i32
    return %arg1, %arg0, %c0_i32 : i32, i32, i32
  }
}

</mosaic_0001>

<llo_original>
// kernel: patch_latent_forward.1
$region0: #{patch_latent_forward.1}
  #allocation0 [shape = 'u32[]', space=smem, size = 0x4, offset = 0x4, fixed_abs, tag = 'smem constant byte address 0x4 - core index']
  #allocation1 [shape = 'u32[72,128]{1,0:T(1,128)}', space=vmem, size = 0x9000, scoped, tag = 'internal scratch']
  %s0 = inlined_call_operand.vmem [shape: f32[2,64,16], index: 0, kind: input, shape index: {}]
  %s1 = inlined_call_operand.vmem [shape: f32[16,32], index: 1, kind: input, shape index: {}]
  %s2 = inlined_call_operand.vmem [shape: f32[64,32], index: 2, kind: input, shape index: {}]
  %s3 = inlined_call_operand.vmem [shape: f32[2,64,32], index: 3, kind: output, shape index: {}]
  %s4 = sld [smem:[#allocation0]]
  $region45: #{patch_latent_forward.1} parent=0
    _
  %s6 = ssub.s32 1, %s4
  %s7 = scalar_select 0, %s6, %s4
  loop: start=0, step=1, limit=6
  $region2: #{patch_latent_forward.1} parent=0 // loop_pre_header
    _
  $region3: #{patch_latent_forward.1} parent=0 // loop_header
    %s9 = sphi 0, %s13
    %p10 = scmp.ge.s32.totalorder %s9, 6
    %s16 = sphi 0, %s28
    %s17 = sphi 0, %s24
    %s18 = sphi 0, %s16
    %s19 = sphi 0, %s17
    %s20 = sphi 0, %s18
    %s21 = sphi 0, %s19
    %s33 = sphi 0, %s35
    %s36 = sphi 0, %s33
    %s37 = sphi 0, %s36
    %s53 = sphi 0, %s37
    %s57 = sphi 0, %s57
    %s59 = sphi 0, %s57
    %s60 = sphi 0, %s59
    %s74 = sphi 0, %s60
    %s80 = sphi 0, %s82
    %s83 = sphi 0, %s80
    %s84 = sphi 0, %s83
    %s100 = sphi 0, %s84
    %s108 = sphi 0, %s110
    %s111 = sphi 0, %s108
    %s112 = sphi 0, %s111
    %s128 = sphi 0, %s112
  $region4: #{patch_latent_forward.1} parent=0 // loop_header_branch
    %12 = sbr.rel (%p10) target = $region8
  $region5: #{patch_latent_forward.1} parent=0 // loop_body
    %s14 = ssub.s32 %s9, 1
    %s15 = ssub.s32 %s9, 2
    %s22 = sadd.s32 1, %s17
    %p23 = scmp.ge.s32.totalorder %s22, 2
    %s24 = scalar_select %p23, 0, %s22
    %s25 = sadd.s32 1, %s16
    %s26 = scalar_select %p23, %s25, %s16
    %p27 = scmp.ge.s32.totalorder %s26, 2
    %s28 = scalar_select %p27, 0, %s26
    %s29 = ssub.s32 %s17, %s24
    %s30 = ssub.s32 %s16, %s28
    %s31 = sor.u32 %s29, %s30
    %p32 = scmp.eq.s32.totalorder %s31, 0
    %s34 = sadd.s32 %s33, 1
    %s35 = scalar_select %p32, %s33, %s34
    %p38 = pneg %p32
    %p39 = scmp.eq.s32.totalorder %s9, 3
    %p40 = por %p38, %p39
    %p41 = scmp.ne.s32.totalorder %s33, %s36
    %p42 = scmp.eq.s32.totalorder %s9, 0
    %p43 = por %p41, %p42
    %p44 = scmp.ne.s32.totalorder %s33, %s36
    %p45 = scmp.eq.s32.totalorder %s14, 3
    %p46 = por %p44, %p45
    %p47 = scmp.ne.s32.totalorder %s36, %s37
    %p48 = scmp.eq.s32.totalorder %s14, 0
    %p49 = por %p47, %p48
    %p50 = scmp.ne.s32.totalorder %s36, %s37
    %p51 = scmp.eq.s32.totalorder %s15, 3
    %p52 = por %p50, %p51
    %p54 = scmp.ne.s32.totalorder %s37, %s53
    %p55 = scmp.eq.s32.totalorder %s15, 0
    %p56 = por %p54, %p55
    %s58 = sadd.s32 %s57, 1
    %p61 = scmp.eq.s32.totalorder %s9, 3
    %p62 = scmp.ne.s32.totalorder %s57, %s59
    %p63 = scmp.eq.s32.totalorder %s9, 0
    %p64 = por %p62, %p63
    %p65 = scmp.ne.s32.totalorder %s57, %s59
    %p66 = scmp.eq.s32.totalorder %s14, 3
    %p67 = por %p65, %p66
    %p68 = scmp.ne.s32.totalorder %s59, %s60
    %p69 = scmp.eq.s32.totalorder %s14, 0
    %p70 = por %p68, %p69
    %p71 = scmp.ne.s32.totalorder %s59, %s60
    %p72 = scmp.eq.s32.totalorder %s15, 3
    %p73 = por %p71, %p72
    %p75 = scmp.ne.s32.totalorder %s60, %s74
    %p76 = scmp.eq.s32.totalorder %s15, 0
    %p77 = por %p75, %p76
    %s78 = ssub.s32 %s16, %s28
    %p79 = scmp.eq.s32.totalorder %s78, 0
    %s81 = sadd.s32 %s80, 1
    %s82 = scalar_select %p79, %s80, %s81
    %p85 = pneg %p79
    %p86 = scmp.eq.s32.totalorder %s9, 3
    %p87 = por %p85, %p86
    %p88 = scmp.ne.s32.totalorder %s80, %s83
    %p89 = scmp.eq.s32.totalorder %s9, 0
    %p90 = por %p88, %p89
    %p91 = scmp.ne.s32.totalorder %s80, %s83
    %p92 = scmp.eq.s32.totalorder %s14, 3
    %p93 = por %p91, %p92
    %p94 = scmp.ne.s32.totalorder %s83, %s84
    %p95 = scmp.eq.s32.totalorder %s14, 0
    %p96 = por %p94, %p95
    %p97 = scmp.ne.s32.totalorder %s83, %s84
    %p98 = scmp.eq.s32.totalorder %s15, 3
    %p99 = por %p97, %p98
    %p101 = scmp.ne.s32.totalorder %s84, %s100
    %p102 = scmp.eq.s32.totalorder %s15, 0
    %p103 = por %p101, %p102
    %s104 = ssub.s32 %s17, %s24
    %s105 = ssub.s32 %s16, %s28
    %s106 = sor.u32 %s104, %s105
    %p107 = scmp.eq.s32.totalorder %s106, 0
    %s109 = sadd.s32 %s108, 1
    %s110 = scalar_select %p107, %s108, %s109
    %p113 = pneg %p107
    %p114 = scmp.eq.s32.totalorder %s9, 3
    %p115 = por %p113, %p114
    %p116 = scmp.ne.s32.totalorder %s108, %s111
    %p117 = scmp.eq.s32.totalorder %s9, 0
    %p118 = por %p116, %p117
    %p119 = scmp.ne.s32.totalorder %s108, %s111
    %p120 = scmp.eq.s32.totalorder %s14, 3
    %p121 = por %p119, %p120
    %p122 = scmp.ne.s32.totalorder %s111, %s112
    %p123 = scmp.eq.s32.totalorder %s14, 0
    %p124 = por %p122, %p123
    %p125 = scmp.ne.s32.totalorder %s111, %s112
    %p126 = scmp.eq.s32.totalorder %s15, 3
    %p127 = por %p125, %p126
    %p129 = scmp.ne.s32.totalorder %s112, %s128
    %p130 = scmp.eq.s32.totalorder %s15, 0
    %p131 = por %p129, %p130
    %p132 = scmp.le.s32.totalorder 1, %s9
    %p133 = scmp.lt.s32.totalorder %s9, 5
    %p134 = pnand %p132, %p133
    %p135 = pneg %p134
    // Predicated region
    $region9: #{patch_latent_forward.1} parent=5 // pred_check
      _
    $region10: #{patch_latent_forward.1} parent=5 // pred_check_branch
      %137 = sbr.rel (%p134) target = $region12
    $region11: #{patch_latent_forward.1} parent=5 // pred_region
      %s138 = ssub.s32 %s9, 1
      // Predicated region
      $region13: #{patch_latent_forward.1} parent=11 // pred_check
        %p139 = pneg %p70
      $region14: #{patch_latent_forward.1} parent=11 // pred_check_branch
        %141 = sbr.rel (%p139) target = $region16
      $region15: #{patch_latent_forward.1} parent=11 // pred_region
        _
      $region16: #{patch_latent_forward.1} parent=11 // pred_fallthru
        _
    $region12: #{patch_latent_forward.1} parent=5 // pred_fallthru
      _
    %p142 = scmp.lt.s32.totalorder %s9, 4
    // Predicated region
    $region17: #{patch_latent_forward.1} parent=5 // pred_check
      %p143 = pneg %p142
    $region18: #{patch_latent_forward.1} parent=5 // pred_check_branch
      %145 = sbr.rel (%p143) target = $region20
    $region19: #{patch_latent_forward.1} parent=5 // pred_region
      // Predicated region
      $region21: #{patch_latent_forward.1} parent=19 // pred_check
        %p146 = pneg %p43
      $region22: #{patch_latent_forward.1} parent=19 // pred_check_branch
        %148 = sbr.rel (%p146) target = $region24
      $region23: #{patch_latent_forward.1} parent=19 // pred_region
        %s149 = smul.u32 4, %s16
        %p150 = scmp.lt.s32.totalorder %s17, 1
        %s151 = scalar_select %p150, %s17, 1
        %p152 = scmp.lt.s32.totalorder %s149, 7
        %s153 = scalar_select %p152, %s149, 7
        %s154 = smul.addr %s151, 8
        %s155 = sadd.s32 %s153, %s154
        %s156 = smul.addr %s155, 8
        %s157 = scalar_lea.vmem %s0, %s156
        %s158 = smul.u32 4, %s16
      $region24: #{patch_latent_forward.1} parent=19 // pred_fallthru
        _
      // Predicated region
      $region25: #{patch_latent_forward.1} parent=19 // pred_check
        %p159 = pneg %p90
      $region26: #{patch_latent_forward.1} parent=19 // pred_check_branch
        %161 = sbr.rel (%p159) target = $region28
      $region27: #{patch_latent_forward.1} parent=19 // pred_region
        %s162 = smul.u32 4, %s16
        %p163 = scmp.lt.s32.totalorder %s162, 7
        %s164 = scalar_select %p163, %s162, 7
        %s165 = smul.addr %s164, 8
        %s166 = scalar_lea.vmem %s2, %s165
        %s167 = smul.u32 4, %s16
      $region28: #{patch_latent_forward.1} parent=19 // pred_fallthru
        _
    $region20: #{patch_latent_forward.1} parent=5 // pred_fallthru
      _
    %p168 = scmp.le.s32.totalorder 1, %s9
    %p169 = scmp.lt.s32.totalorder %s9, 5
    %p170 = pnand %p168, %p169
    %p171 = pneg %p170
    // Predicated region
    $region29: #{patch_latent_forward.1} parent=5 // pred_check
      _
    $region30: #{patch_latent_forward.1} parent=5 // pred_check_branch
      %173 = sbr.rel (%p170) target = $region32
    $region31: #{patch_latent_forward.1} parent=5 // pred_region
      %s174 = ssub.s32 %s9, 1
      %s175 = smul.u32 4, %s18
      %p176 = scmp.lt.s32.totalorder %s19, 1
      %s177 = scalar_select %p176, %s19, 1
      %p178 = scmp.lt.s32.totalorder %s175, 7
      %s179 = scalar_select %p178, %s175, 7
      %s180 = smul.addr %s177, 8
      %s181 = sadd.s32 %s179, %s180
      %s182 = smul.addr %s181, 8
      %s183 = scalar_lea.vmem %s0, %s182
      %p184 = pneg %p49
      %p185 = pneg %p46
      %p186 = pneg %p70
      %p187 = pneg %p67
      %s188 = smul.u32 4, %s18
      %p189 = scmp.lt.s32.totalorder %s188, 7
      %s190 = scalar_select %p189, %s188, 7
      %s191 = smul.addr %s190, 8
      %s192 = scalar_lea.vmem %s2, %s191
      %p193 = pneg %p96
      %p194 = pneg %p93
      %p195 = pneg %p124
      %p196 = pneg %p121
      %s197 = smul.u32 4, %s18
      %p198 = scmp.lt.s32.totalorder %s19, 1
      %s199 = scalar_select %p198, %s19, 1
      %p200 = scmp.lt.s32.totalorder %s197, 7
      %s201 = scalar_select %p200, %s197, 7
      %s202 = smul.addr %s199, 8
      %s203 = sadd.s32 %s201, %s202
      %s204 = smul.addr %s203, 8
      %s205 = scalar_lea.vmem %s3, %s204
      %s206 = smul.u32 4, %s18
      %p207 = scmp.lt.s32.totalorder %s19, 1
      %s208 = scalar_select %p207, %s19, 1
      %p209 = scmp.lt.s32.totalorder %s206, 7
      %s210 = scalar_select %p209, %s206, 7
      %s211 = smul.addr %s208, 8
      %s212 = sadd.s32 %s210, %s211
      %s213 = smul.addr %s212, 8
      %s214 = scalar_lea.vmem %s0, %s213
      %s215 = smul.u32 4, %s18
      %s216 = smul.u32 4, %s18
      %p217 = scmp.lt.s32.totalorder %s216, 7
      %s218 = scalar_select %p217, %s216, 7
      %s219 = smul.addr %s218, 8
      %s220 = scalar_lea.vmem %s2, %s219
      %s221 = smul.u32 4, %s18
      %s222 = smul.u32 4, %s18
      %p223 = scmp.lt.s32.totalorder %s19, 1
      %s224 = scalar_select %p223, %s19, 1
      %p225 = scmp.lt.s32.totalorder %s222, 7
      %s226 = scalar_select %p225, %s222, 7
      %s227 = smul.addr %s224, 8
      %s228 = sadd.s32 %s226, %s227
      %s229 = smul.addr %s228, 8
      %s230 = scalar_lea.vmem %s3, %s229
      %s231 = smul.u32 4, %s18
      %v232 = vld [vmem:[%s214] sm:$0xff]
      %v233 = vld [vmem:[%s214 + $0x8] sm:$0xff]
      %v234 = vld [vmem:[%s214 + $0x10] sm:$0xff]
      %v235 = vld [vmem:[%s214 + $0x18] sm:$0xff]
      %v236 = vld [vmem:[%s1] sm:$0xff]
      %v237 = vld [vmem:[%s1 + $0x8] sm:$0xff]
      %v238 = vld [vmem:[%s220] sm:$0xff]
      %v239 = vld [vmem:[%s220 + $0x8] sm:$0xff]
      %v240 = vld [vmem:[%s220 + $0x10] sm:$0xff]
      %v241 = vld [vmem:[%s220 + $0x18] sm:$0xff]
      %vm242 = vcmask 130048
      %v244 = vsel %vm242, %v232, 0
      %v247 = vsel %vm242, %v233, 0
      %v250 = vsel %vm242, %v234, 0
      %v253 = vsel %vm242, %v235, 0
      %255 = vmatpush.msra.mxu0 0.0
      %256 = vmatpush.msra.mxu0 0.0
      %257 = vmatpush.msra.mxu0 0.0
      %258 = vmatpush.msra.mxu0 0.0
      %259 = vmatpush.msra.mxu0 0.0
      %260 = vmatpush.msra.mxu0 0.0
      %261 = vmatpush.msra.mxu0 0.0
      %262 = vmatpush.msra.mxu0 0.0
      %263 = vmatpush.msra.mxu0 0.0
      %264 = vmatpush.msra.mxu0 0.0
      %265 = vmatpush.msra.mxu0 0.0
      %266 = vmatpush.msra.mxu0 0.0
      %267 = vmatpush.msra.mxu0 0.0
      %268 = vmatpush.msra.mxu0 0.0
      %269 = vmatpush.msra.mxu0 %v237
      %270 = vmatpush.msra.mxu0 %v236
      %271 = vmatmul.f32.gmra.mxu0 %v244
      %v272 = vpop.f32.mrf.mxu0
      %v273 = vadd.f32 %v238, %v272
      %274 = vmatmul.f32.gmra.mxu0 %v247
      %v275 = vpop.f32.mrf.mxu0
      %v276 = vadd.f32 %v239, %v275
      %277 = vmatmul.f32.gmra.mxu0 %v250
      %v278 = vpop.f32.mrf.mxu0
      %v279 = vadd.f32 %v240, %v278
      %280 = vmatmul.f32.gmra.mxu0 %v253
      %v281 = vpop.f32.mrf.mxu0
      %v282 = vadd.f32 %v241, %v281
      %283 = vdwg.mxu0
      %vm284 = vcmask 261120
      %285 = vst.msk [vmem:[%s230] sm:$0xff] %vm284, %v273
      %286 = vst.msk [vmem:[%s230 + $0x8] sm:$0xff] %vm284, %v276
      %287 = vst.msk [vmem:[%s230 + $0x10] sm:$0xff] %vm284, %v279
      %288 = vst.msk [vmem:[%s230 + $0x18] sm:$0xff] %vm284, %v282
      %s289 = smul.u32 4, %s18
      %p290 = scmp.lt.s32.totalorder %s19, 1
      %s291 = scalar_select %p290, %s19, 1
      %p292 = scmp.lt.s32.totalorder %s289, 7
      %s293 = scalar_select %p292, %s289, 7
      %s294 = smul.addr %s291, 8
      %s295 = sadd.s32 %s293, %s294
      %s296 = smul.addr %s295, 8
      %s297 = scalar_lea.vmem %s3, %s296
      // Predicated region
      $region33: #{patch_latent_forward.1} parent=31 // pred_check
        %p298 = pneg %p121
      $region34: #{patch_latent_forward.1} parent=31 // pred_check_branch
        %300 = sbr.rel (%p298) target = $region36
      $region35: #{patch_latent_forward.1} parent=31 // pred_region
        %s301 = smul.u32 4, %s18
      $region36: #{patch_latent_forward.1} parent=31 // pred_fallthru
        _
    $region32: #{patch_latent_forward.1} parent=5 // pred_fallthru
      _
    %p302 = scmp.le.s32.totalorder 2, %s9
    // Predicated region
    $region37: #{patch_latent_forward.1} parent=5 // pred_check
      %p303 = pneg %p302
    $region38: #{patch_latent_forward.1} parent=5 // pred_check_branch
      %305 = sbr.rel (%p303) target = $region40
    $region39: #{patch_latent_forward.1} parent=5 // pred_region
      %s306 = ssub.s32 %s9, 2
      // Predicated region
      $region41: #{patch_latent_forward.1} parent=39 // pred_check
        %p307 = pneg %p127
      $region42: #{patch_latent_forward.1} parent=39 // pred_check_branch
        %309 = sbr.rel (%p307) target = $region44
      $region43: #{patch_latent_forward.1} parent=39 // pred_region
        %s310 = smul.u32 4, %s20
        %p311 = scmp.lt.s32.totalorder %s21, 1
        %s312 = scalar_select %p311, %s21, 1
        %p313 = scmp.lt.s32.totalorder %s310, 7
        %s314 = scalar_select %p313, %s310, 7
        %s315 = smul.addr %s312, 8
        %s316 = sadd.s32 %s314, %s315
        %s317 = smul.addr %s316, 8
        %s318 = scalar_lea.vmem %s3, %s317
      $region44: #{patch_latent_forward.1} parent=39 // pred_fallthru
        _
    $region40: #{patch_latent_forward.1} parent=5 // pred_fallthru
      _
  $region6: #{patch_latent_forward.1} parent=0 // loop_footer
    %s13 = sadd.s32 1, %s9
  $region7: #{patch_latent_forward.1} parent=0 // loop_footer_branch
    %8 = sbr.rel target = $region3
  $region8: #{patch_latent_forward.1} parent=0 // loop_exit
    _

</llo_original>
